<compile_context>
chip_gen: v5e
topology: v5e:2x2
jax: 0.10.0
libtpu: 0.0.40
codegen_flags: <defaults>
</compile_context>

<pallas_src>
import jax
import jax.numpy as jnp
from jax.experimental import pallas as pl
from jax.experimental.pallas import tpu as pltpu


def policy_kernel(x_ref, w1_ref, w2_ref, o_ref):
    # x:     (B, S)
    # w1cat: (S+1, 128)  = [W1^T ; b1]
    # w2cat: (129, A)    = [W2^T ; b2]
    # o:     (B, A)
    x = x_ref[...]
    S = x_ref.shape[1]
    H = w2_ref.shape[0] - 1  # 128

    # layer1 + ReLU: (B,S) @ (S,128) + (1,128) -> (B,128). MXU, f32 accumulate.
    # Static, sublane-aligned splits (S and H are multiples of 8).
    h = jnp.dot(x, w1_ref[:S, :], preferred_element_type=jnp.float32)
    h = h + w1_ref[S:S + 1, :]
    h = jnp.maximum(h, 0.0)

    # layer2: (B,128) @ (128,A) + (1,A) -> (B,A).
    logits = jnp.dot(h, w2_ref[:H, :], preferred_element_type=jnp.float32)
    logits = logits + w2_ref[H:H + 1, :]

    # softmax over dim=0 (batch axis), numerically stable.
    m = jnp.max(logits, axis=0, keepdims=True)
    e = jnp.exp(logits - m)
    denom = jnp.sum(e, axis=0, keepdims=True)
    # Exact reciprocal: approx=True (EUP vrcp) would break 1e-5 agreement.
    o_ref[...] = (e * pl.reciprocal(denom, approx=False)).astype(o_ref.dtype)


def prepare_policy_params(w1, b1, w2, b2):
    """One-time (init) parameter folding — NOT per call.

    w1: (128, S), b1: (128,), w2: (A, 128), b2: (A,)
    Returns w1cat: (S+1, 128), w2cat: (129, A).
    """
    w1cat = jnp.concatenate([w1.T, b1[None, :]], axis=0)
    w2cat = jnp.concatenate([w2.T, b2[None, :]], axis=0)
    return w1cat, w2cat


@jax.jit
def policy_forward(x, w1cat, w2cat):
    """x: (B, S); w1cat: (S+1, 128); w2cat: (129, A)."""
    B = x.shape[0]
    A = w2cat.shape[1]

    vmem_spec = pl.BlockSpec(memory_space=pltpu.MemorySpace.VMEM)

    return pl.pallas_call(
        policy_kernel,
        out_shape=jax.ShapeDtypeStruct((B, A), jnp.float32),
        in_specs=[vmem_spec] * 3,
        out_specs=vmem_spec,
    )(x, w1cat, w2cat)


if __name__ == "__main__":
    # Small shapes consistent with the module
    batch = 8
    state_size = 32
    action_size = 4
    hidden = 128

    key = jax.random.PRNGKey(0)
    kx, k1, k2, k3, k4 = jax.random.split(key, 5)

    x = jax.random.normal(kx, (batch, state_size), dtype=jnp.float32)

    # Deterministic parameter init (PyTorch Linear shapes: (out, in), (out,))
    w1 = jax.random.normal(k1, (hidden, state_size), dtype=jnp.float32) * 0.1
    b1 = jax.random.normal(k2, (hidden,), dtype=jnp.float32) * 0.1
    w2 = jax.random.normal(k3, (action_size, hidden), dtype=jnp.float32) * 0.1
    b2 = jax.random.normal(k4, (action_size,), dtype=jnp.float32) * 0.1

    # Init-time fold (outside the jitted per-call path).
    w1cat, w2cat = prepare_policy_params(w1, b1, w2, b2)
    w1cat, w2cat = jax.block_until_ready((w1cat, w2cat))

    out = policy_forward(x, w1cat, w2cat)
    out = jax.block_until_ready(out)

    # Pure-JAX reference check (same math, softmax over dim=0)
    h_ref = jnp.maximum(x @ w1.T + b1, 0.0)
    logits_ref = h_ref @ w2.T + b2
    ref = jax.nn.softmax(logits_ref, axis=0)

    assert out.shape == (batch, action_size)
    assert jnp.allclose(out, ref, atol=1e-5, rtol=1e-5), "mismatch vs reference"

    print("KERNEL_OK")
</pallas_src>

<mosaic_0001>
module attributes {stable_mosaic.version = 11 : i64} {
  func.func @policy_kernel(%arg0: memref<8x32xf32, #tpu.memory_space<vmem>>, %arg1: memref<33x128xf32, #tpu.memory_space<vmem>>, %arg2: memref<129x4xf32, #tpu.memory_space<vmem>>, %arg3: memref<8x4xf32, #tpu.memory_space<vmem>>) attributes {dimension_semantics = [], scalar_prefetch = 0 : i64, scratch_operands = 0 : i64, tpu.core_type = #tpu.core_type<tc>} {
    %c0 = arith.constant 0 : index
    %c0_0 = arith.constant 0 : index
    %0 = vector.load %arg0[%c0, %c0_0] : memref<8x32xf32, #tpu.memory_space<vmem>>, vector<8x32xf32>
    %c0_1 = arith.constant 0 : index
    %c0_2 = arith.constant 0 : index
    %1 = vector.load %arg1[%c0_1, %c0_2] : memref<33x128xf32, #tpu.memory_space<vmem>>, vector<32x128xf32>
    %cst = arith.constant dense<0.000000e+00> : vector<8x128xf32>
    %2 = tpu.matmul %0, %1, %cst {dimension_numbers = #tpu.dot_dimension_numbers<[1], [0], [0], [1], [0, 0, 1, 1], [], []>} : vector<8x32xf32>, vector<32x128xf32>, vector<8x128xf32> -> vector<8x128xf32>
    %c32 = arith.constant 32 : index
    %c0_3 = arith.constant 0 : index
    %3 = vector.load %arg1[%c32, %c0_3] : memref<33x128xf32, #tpu.memory_space<vmem>>, vector<1x128xf32>
    %4 = vector.broadcast %3 : vector<1x128xf32> to vector<8x128xf32>
    %5 = arith.addf %2, %4 : vector<8x128xf32>
    %cst_4 = arith.constant 0.000000e+00 : f32
    %6 = vector.broadcast %cst_4 : f32 to vector<8x128xf32>
    %7 = arith.maximumf %5, %6 : vector<8x128xf32>
    %c0_5 = arith.constant 0 : index
    %c0_6 = arith.constant 0 : index
    %8 = vector.load %arg2[%c0_5, %c0_6] : memref<129x4xf32, #tpu.memory_space<vmem>>, vector<128x4xf32>
    %cst_7 = arith.constant dense<0.000000e+00> : vector<8x4xf32>
    %9 = tpu.matmul %7, %8, %cst_7 {dimension_numbers = #tpu.dot_dimension_numbers<[1], [0], [0], [1], [0, 0, 1, 1], [], []>} : vector<8x128xf32>, vector<128x4xf32>, vector<8x4xf32> -> vector<8x4xf32>
    %c128 = arith.constant 128 : index
    %c0_8 = arith.constant 0 : index
    %10 = vector.load %arg2[%c128, %c0_8] : memref<129x4xf32, #tpu.memory_space<vmem>>, vector<1x4xf32>
    %11 = vector.broadcast %10 : vector<1x4xf32> to vector<8x4xf32>
    %12 = arith.addf %9, %11 : vector<8x4xf32>
    %cst_9 = arith.constant dense<0xFF800000> : vector<4xf32>
    %13 = vector.multi_reduction <maximumf>, %12, %cst_9 [0] : vector<8x4xf32> to vector<4xf32>
    %14 = vector.shape_cast %13 : vector<4xf32> to vector<1x4xf32>
    %15 = vector.broadcast %14 : vector<1x4xf32> to vector<8x4xf32>
    %16 = arith.subf %12, %15 : vector<8x4xf32>
    %17 = math.exp %16 : vector<8x4xf32>
    %cst_10 = arith.constant dense<0.000000e+00> : vector<4xf32>
    %18 = vector.multi_reduction <add>, %17, %cst_10 [0] : vector<8x4xf32> to vector<4xf32>
    %19 = vector.shape_cast %18 : vector<4xf32> to vector<1x4xf32>
    %20 = tpu.reciprocal %19 : vector<1x4xf32> -> vector<1x4xf32>
    %21 = vector.broadcast %20 : vector<1x4xf32> to vector<8x4xf32>
    %22 = arith.mulf %17, %21 : vector<8x4xf32>
    %c0_11 = arith.constant 0 : index
    %c0_12 = arith.constant 0 : index
    %23 = vector.load %arg3[%c0_11, %c0_12] : memref<8x4xf32, #tpu.memory_space<vmem>>, vector<8x4xf32>
    tpu.vector_store %arg3[%c0_11, %c0_12], %22 {strides = array<i32>} : memref<8x4xf32, #tpu.memory_space<vmem>>, vector<8x4xf32>,
    return
  }
}

</mosaic_0001>

<llo_original>
// kernel: policy_forward.1
$region0: #{policy_forward.1}
  #allocation0 [shape = 'u32[]', space=smem, size = 0x4, offset = 0x4, fixed_abs, tag = 'smem constant byte address 0x4 - core index']
  #allocation1 [shape = 'u32[72,128]{1,0:T(1,128)}', space=vmem, size = 0x9000, scoped, tag = 'internal scratch']
  %s0 = inlined_call_operand.vmem [shape: f32[8,32], index: 0, kind: input, shape index: {}]
  %s1 = inlined_call_operand.vmem [shape: f32[33,128], index: 1, kind: input, shape index: {}]
  %s2 = inlined_call_operand.vmem [shape: f32[129,4], index: 2, kind: input, shape index: {}]
  %s3 = inlined_call_operand.vmem [shape: f32[8,4], index: 3, kind: output, shape index: {}]
  %s4 = sld [smem:[#allocation0]]
  $region22: #{policy_forward.1} parent=0
    _
  %s6 = ssub.s32 1, %s4
  %s7 = scalar_select 0, %s6, %s4
  // Predicated region
  $region2: #{policy_forward.1} parent=0 // pred_check
    _
  $region3: #{policy_forward.1} parent=0 // pred_check_branch
    %9 = sbr.rel (0) target = $region5
  $region4: #{policy_forward.1} parent=0 // pred_region
    _
  $region5: #{policy_forward.1} parent=0 // pred_fallthru
    _
  // Predicated region
  $region6: #{policy_forward.1} parent=0 // pred_check
    _
  $region7: #{policy_forward.1} parent=0 // pred_check_branch
    %11 = sbr.rel (0) target = $region9
  $region8: #{policy_forward.1} parent=0 // pred_region
    _
  $region9: #{policy_forward.1} parent=0 // pred_fallthru
    _
  // Predicated region
  $region10: #{policy_forward.1} parent=0 // pred_check
    _
  $region11: #{policy_forward.1} parent=0 // pred_check_branch
    %13 = sbr.rel (0) target = $region13
  $region12: #{policy_forward.1} parent=0 // pred_region
    _
  $region13: #{policy_forward.1} parent=0 // pred_fallthru
    _
  %v14 = vld [vmem:[%s0] sm:$0xff]
  %v15 = vld [vmem:[%s1] sm:$0xff]
  %v16 = vld [vmem:[%s1 + $0x8] sm:$0xff]
  %v17 = vld [vmem:[%s1 + $0x10] sm:$0xff]
  %v18 = vld [vmem:[%s1 + $0x18] sm:$0xff]
  %v19 = vld [vmem:[%s1 + $0x20] sm:$0x1]
  %v20 = vperm.slane %v19, 0
  %vm21 = vcmask 261120
  %v23 = vsel %vm21, %v14, 0
  %25 = vmatpush.msra.mxu0 0.0
  %26 = vmatpush.msra.mxu0 0.0
  %27 = vmatpush.msra.mxu0 0.0
  %28 = vmatpush.msra.mxu0 0.0
  %29 = vmatpush.msra.mxu0 0.0
  %30 = vmatpush.msra.mxu0 0.0
  %31 = vmatpush.msra.mxu0 0.0
  %32 = vmatpush.msra.mxu0 0.0
  %33 = vmatpush.msra.mxu0 0.0
  %34 = vmatpush.msra.mxu0 0.0
  %35 = vmatpush.msra.mxu0 0.0
  %36 = vmatpush.msra.mxu0 0.0
  %37 = vmatpush.msra.mxu0 %v18
  %38 = vmatpush.msra.mxu0 %v17
  %39 = vmatpush.msra.mxu0 %v16
  %40 = vmatpush.msra.mxu0 %v15
  %41 = vmatmul.f32.gmra.mxu0 %v23
  %v42 = vpop.f32.mrf.mxu0
  %v43 = vadd.f32 %v20, %v42
  %44 = vdwg.mxu0
  %v45 = vmax.f32 %v43, 0.0
  %v46 = vld [vmem:[%s2] sm:$0xff]
  %v47 = vld [vmem:[%s2 + $0x8] sm:$0xff]
  %v48 = vld [vmem:[%s2 + $0x10] sm:$0xff]
  %v49 = vld [vmem:[%s2 + $0x18] sm:$0xff]
  %v50 = vld [vmem:[%s2 + $0x20] sm:$0xff]
  %v51 = vld [vmem:[%s2 + $0x28] sm:$0xff]
  %v52 = vld [vmem:[%s2 + $0x30] sm:$0xff]
  %v53 = vld [vmem:[%s2 + $0x38] sm:$0xff]
  %v54 = vld [vmem:[%s2 + $0x40] sm:$0xff]
  %v55 = vld [vmem:[%s2 + $0x48] sm:$0xff]
  %v56 = vld [vmem:[%s2 + $0x50] sm:$0xff]
  %v57 = vld [vmem:[%s2 + $0x58] sm:$0xff]
  %v58 = vld [vmem:[%s2 + $0x60] sm:$0xff]
  %v59 = vld [vmem:[%s2 + $0x68] sm:$0xff]
  %v60 = vld [vmem:[%s2 + $0x70] sm:$0xff]
  %v61 = vld [vmem:[%s2 + $0x78] sm:$0xff]
  %v62 = vld [vmem:[%s2 + $0x80] sm:$0x1]
  %v63 = vperm.slane %v62, 0
  %64 = vmatpush.msra.mxu0 %v61
  %65 = vmatpush.msra.mxu0 %v60
  %66 = vmatpush.msra.mxu0 %v59
  %67 = vmatpush.msra.mxu0 %v58
  %68 = vmatpush.msra.mxu0 %v57
  %69 = vmatpush.msra.mxu0 %v56
  %70 = vmatpush.msra.mxu0 %v55
  %71 = vmatpush.msra.mxu0 %v54
  %72 = vmatpush.msra.mxu0 %v53
  %73 = vmatpush.msra.mxu0 %v52
  %74 = vmatpush.msra.mxu0 %v51
  %75 = vmatpush.msra.mxu0 %v50
  %76 = vmatpush.msra.mxu0 %v49
  %77 = vmatpush.msra.mxu0 %v48
  %78 = vmatpush.msra.mxu0 %v47
  %79 = vmatpush.msra.mxu0 %v46
  %80 = vmatmul.f32.gmra.mxu0 %v45
  %v81 = vpop.f32.mrf.mxu0
  %v82 = vadd.f32 %v63, %v81
  %83 = vdwg.mxu0
  %vm84 = vcmask 31744
  %v85 = vsel %vm84, %v82, -inf
  %v86 = vrot.slane %v85, 4
  %v87 = vmax.f32 %v85, %v86
  %v88 = vrot.slane %v87, 2
  %v89 = vmax.f32 %v87, %v88
  %v90 = vrot.slane %v89, 1
  %v91 = vmax.f32 %v89, %v90
  %v92 = vsub.f32 %v82, %v91
  %v93 = vmul.f32 %v92, 1.442695
  %v94 = vpow.pop %v93
  %v95 = vsel %vm84, %v94, 0.0
  %v96 = vrot.slane %v95, 4
  %v97 = vadd.f32 %v95, %v96
  %v98 = vrot.slane %v97, 2
  %v99 = vadd.f32 %v97, %v98
  %v100 = vrot.slane %v99, 1
  %v101 = vadd.f32 %v99, %v100
  %v102 = vrcp.pop %v101
  %v103 = vmul.f32 %v101, %v102
  %v104 = vsub.f32 1.0, %v103
  %v105 = vmul.f32 %v102, %v104
  %v106 = vadd.f32 %v102, %v105
  %vm107 = vweird.f32 %v101
  %vm108 = vweird.f32 %v102
  %vm109 = vmor %vm107, %vm108
  %v110 = vsel %vm109, %v102, %v106
  %v111 = vand.u32 2147483647, %v101
  %vm112 = vcmp.eq.f32.partialorder %v111, 8.507059e+37
  %v113 = vand.u32 %v101, 2147483648
  %v114 = vor.u32 1.1754944e-38, %v113
  %v115 = vsel %vm112, %v114, %v110
  %v116 = vmul.f32 %v94, %v115
  %117 = vst.msk [vmem:[%s3] sm:$0xff] %vm84, %v116
  // Predicated region
  $region14: #{policy_forward.1} parent=0 // pred_check
    _
  $region15: #{policy_forward.1} parent=0 // pred_check_branch
    %119 = sbr.rel (0) target = $region17
  $region16: #{policy_forward.1} parent=0 // pred_region
    _
  $region17: #{policy_forward.1} parent=0 // pred_fallthru
    _
  // Predicated region
  $region18: #{policy_forward.1} parent=0 // pred_check
    _
  $region19: #{policy_forward.1} parent=0 // pred_check_branch
    %121 = sbr.rel (0) target = $region21
  $region20: #{policy_forward.1} parent=0 // pred_region
    _
  $region21: #{policy_forward.1} parent=0 // pred_fallthru
    _

</llo_original>
